<compile_context>
chip_gen: v7x
topology: tpu7x:2x2x1
jax: 0.10.0
libtpu: 0.0.40
codegen_flags: <defaults>
</compile_context>

<pallas_src>
import jax
import jax.numpy as jnp
from jax.experimental import pallas as pl
from jax.experimental.pallas import tpu as pltpu


def _round_up(n, m):
    return ((n + m - 1) // m) * m


def _cdiv(a, b):
    return (a + b - 1) // b


def valuenet_kernel(x_ref, w1_ref, b1_ref, w2_ref, b2_ref, o_ref):
    # x_ref : (TM, S)  natural-layout batch tile (no host-side transpose)
    # w1_ref: (S, H)   first-layer weight, resident in VMEM
    # b1_ref: (1, H)   first-layer bias (sublane broadcast, cheap)
    # w2_ref: (1, H)   second-layer weight as a row
    # b2_ref: (1, 1)   second-layer bias (SMEM scalar)
    # o_ref : (TM, 1)  per-row value output
    h = jnp.dot(x_ref[...], w1_ref[...],
                preferred_element_type=jnp.float32)          # (TM, H) on MXU
    h = jnp.maximum(h + b1_ref[...], 0.0)                    # bias + ReLU (VPU)
    # Width-1 second Linear: VPU multiply + lane reduction instead of an
    # N=1 MXU matmul.
    o = jnp.sum(h * w2_ref[...], axis=1, keepdims=True)      # (TM, 1)
    o_ref[...] = jnp.maximum(o + b2_ref[0, 0], 0.0)          # final bias + ReLU


def value_net_forward(x, w1, b1, w2, b2, *, tm_max=4096):
    """x: (B, state_dim) f32; w1: (S, H); b1: (H,); w2: (H, 1); b2: (1,) -> (B, 1) f32."""
    B, S = x.shape
    H = w1.shape[1]

    x = x.astype(jnp.float32)                       # natural layout, no transpose
    w1c = w1.astype(jnp.float32)                    # (S, H)
    b1r = b1.reshape(1, H).astype(jnp.float32)      # (1, H)
    w2r = w2.reshape(1, H).astype(jnp.float32)      # (1, H)
    b2c = b2.reshape(1, 1).astype(jnp.float32)      # (1, 1) SMEM scalar

    # Tiling: pad batch (sublane axis) to a multiple of 8 only, then pick the
    # tile count / size.  Keep grid >= 2 when there is enough work so both
    # TensorCores on v7x get a share; cap TM at tm_max.
    B_pad8 = _round_up(max(B, 1), 8)
    n_tiles = _cdiv(B_pad8, tm_max)
    if B_pad8 >= 512:
        n_tiles = max(n_tiles, 2)
    TM = _round_up(_cdiv(B_pad8, n_tiles), 8)
    B_pad = n_tiles * TM
    if B_pad != B:
        # Padded rows compute relu(relu(b1) @ w2 + b2) garbage; sliced off below.
        x = jnp.pad(x, ((0, B_pad - B), (0, 0)))
    grid = (n_tiles,)

    flops = 2 * B_pad * (S * H + H)
    bytes_accessed = 4 * (B_pad * S + S * H + H + H + 1 + B_pad)

    out = pl.pallas_call(
        valuenet_kernel,
        out_shape=jax.ShapeDtypeStruct((B_pad, 1), jnp.float32),
        grid=grid,
        in_specs=[
            pl.BlockSpec((TM, S), lambda i: (i, 0)),                    # x tile (pipelined)
            pl.BlockSpec((S, H), lambda i: (0, 0)),                     # W1  (resident)
            pl.BlockSpec((1, H), lambda i: (0, 0)),                     # b1  (resident)
            pl.BlockSpec((1, H), lambda i: (0, 0)),                     # w2  (resident)
            pl.BlockSpec(memory_space=pltpu.MemorySpace.SMEM),          # b2 scalar
        ],
        out_specs=pl.BlockSpec((TM, 1), lambda i: (i, 0)),
        compiler_params=pltpu.CompilerParams(
            dimension_semantics=("parallel",),
            vmem_limit_bytes=32 * 1024 * 1024),
        cost_estimate=pl.CostEstimate(
            flops=flops, transcendentals=0, bytes_accessed=bytes_accessed),
    )(x, w1c, b1r, w2r, b2c)

    return out[:B]


def init_params(key, state_dim, hidden_dim):
    """Deterministic init mimicking PyTorch nn.Linear default U[-1/sqrt(fan_in), +1/sqrt(fan_in)]."""
    k1, k2, k3, k4 = jax.random.split(key, 4)
    bound1 = 1.0 / jnp.sqrt(state_dim)
    bound2 = 1.0 / jnp.sqrt(hidden_dim)
    w1 = jax.random.uniform(k1, (state_dim, hidden_dim), jnp.float32, -bound1, bound1)
    b1 = jax.random.uniform(k2, (hidden_dim,), jnp.float32, -bound1, bound1)
    w2 = jax.random.uniform(k3, (hidden_dim, 1), jnp.float32, -bound2, bound2)
    b2 = jax.random.uniform(k4, (1,), jnp.float32, -bound2, bound2)
    return w1, b1, w2, b2


def _reference(x, w1, b1, w2, b2):
    return jnp.maximum(jnp.maximum(x @ w1 + b1, 0.0) @ w2 + b2, 0.0)


if __name__ == "__main__":
    # CartPole-v0: state_dim = 4; hidden_dim = 128 (module globals).
    state_dim = 4
    hidden_dim = 128

    key = jax.random.PRNGKey(0)
    kx, kp, kx2 = jax.random.split(key, 3)
    w1, b1, w2, b2 = init_params(kp, state_dim, hidden_dim)

    # Small batch (single tile, sublane padding only).
    batch = 8
    x = jax.random.normal(kx, (batch, state_dim), jnp.float32)
    out = jax.block_until_ready(value_net_forward(x, w1, b1, w2, b2))
    ref = _reference(x, w1, b1, w2, b2)
    assert out.shape == (batch, 1)
    assert jnp.allclose(out, ref, atol=1e-5, rtol=1e-5)

    # Larger batch to exercise the multi-tile grid path (grid >= 2, padding).
    batch2 = 2500
    x2 = jax.random.normal(kx2, (batch2, state_dim), jnp.float32)
    out2 = jax.block_until_ready(value_net_forward(x2, w1, b1, w2, b2))
    ref2 = _reference(x2, w1, b1, w2, b2)
    assert out2.shape == (batch2, 1)
    assert jnp.allclose(out2, ref2, atol=1e-5, rtol=1e-5)

    print("KERNEL_OK")
</pallas_src>

<mosaic_0001>
module attributes {stable_mosaic.version = 11 : i64} {
  func.func @valuenet_kernel(%arg0: i32, %arg1: memref<8x4xf32, #tpu.memory_space<vmem>>, %arg2: memref<4x128xf32, #tpu.memory_space<vmem>>, %arg3: memref<1x128xf32, #tpu.memory_space<vmem>>, %arg4: memref<1x128xf32, #tpu.memory_space<vmem>>, %arg5: memref<1x1xf32, #tpu.memory_space<smem>>, %arg6: memref<8x1xf32, #tpu.memory_space<vmem>>) attributes {dimension_semantics = [#tpu.dimension_semantics<parallel>], iteration_bounds = array<i64: 1>, scalar_prefetch = 0 : i64, scratch_operands = 0 : i64, tpu.core_type = #tpu.core_type<tc>, window_params = [{transform_indices = @transform_0, window_bounds = array<i64: 8, 4>}, {pipeline_mode = #tpu.pipeline_mode<synchronous>, transform_indices = @transform_1, window_bounds = array<i64: 4, 128>}, {pipeline_mode = #tpu.pipeline_mode<synchronous>, transform_indices = @transform_2, window_bounds = array<i64: 1, 128>}, {pipeline_mode = #tpu.pipeline_mode<synchronous>, transform_indices = @transform_3, window_bounds = array<i64: 1, 128>}, {transform_indices = @transform_4, window_bounds = array<i64: 1, 1>}, {transform_indices = @transform_5, window_bounds = array<i64: 8, 1>}]} {
    %c0 = arith.constant 0 : index
    %c0_0 = arith.constant 0 : index
    %0 = vector.load %arg1[%c0, %c0_0] : memref<8x4xf32, #tpu.memory_space<vmem>>, vector<8x4xf32>
    %c0_1 = arith.constant 0 : index
    %c0_2 = arith.constant 0 : index
    %1 = vector.load %arg2[%c0_1, %c0_2] : memref<4x128xf32, #tpu.memory_space<vmem>>, vector<4x128xf32>
    %cst = arith.constant dense<0.000000e+00> : vector<8x128xf32>
    %2 = tpu.matmul %0, %1, %cst {dimension_numbers = #tpu.dot_dimension_numbers<[1], [0], [0], [1], [0, 0, 1, 1], [], []>} : vector<8x4xf32>, vector<4x128xf32>, vector<8x128xf32> -> vector<8x128xf32>
    %c0_3 = arith.constant 0 : index
    %c0_4 = arith.constant 0 : index
    %3 = vector.load %arg3[%c0_3, %c0_4] : memref<1x128xf32, #tpu.memory_space<vmem>>, vector<1x128xf32>
    %4 = vector.broadcast %3 : vector<1x128xf32> to vector<8x128xf32>
    %5 = arith.addf %2, %4 : vector<8x128xf32>
    %cst_5 = arith.constant 0.000000e+00 : f32
    %6 = vector.broadcast %cst_5 : f32 to vector<8x128xf32>
    %7 = arith.maximumf %5, %6 : vector<8x128xf32>
    %c0_6 = arith.constant 0 : index
    %c0_7 = arith.constant 0 : index
    %8 = vector.load %arg4[%c0_6, %c0_7] : memref<1x128xf32, #tpu.memory_space<vmem>>, vector<1x128xf32>
    %9 = vector.broadcast %8 : vector<1x128xf32> to vector<8x128xf32>
    %10 = arith.mulf %7, %9 : vector<8x128xf32>
    %cst_8 = arith.constant dense<0.000000e+00> : vector<8xf32>
    %11 = vector.multi_reduction <add>, %10, %cst_8 [1] : vector<8x128xf32> to vector<8xf32>
    %12 = vector.shape_cast %11 : vector<8xf32> to vector<8x1xf32>
    %c0_9 = arith.constant 0 : index
    %c0_10 = arith.constant 0 : index
    %13 = memref.load %arg5[%c0_9, %c0_10] : memref<1x1xf32, #tpu.memory_space<smem>>
    %14 = vector.broadcast %13 : f32 to vector<8x1xf32>
    %15 = arith.addf %12, %14 : vector<8x1xf32>
    %cst_11 = arith.constant 0.000000e+00 : f32
    %16 = vector.broadcast %cst_11 : f32 to vector<8x1xf32>
    %17 = arith.maximumf %15, %16 : vector<8x1xf32>
    %c0_12 = arith.constant 0 : index
    %c0_13 = arith.constant 0 : index
    %18 = vector.load %arg6[%c0_12, %c0_13] : memref<8x1xf32, #tpu.memory_space<vmem>>, vector<8x1xf32>
    tpu.vector_store %arg6[%c0_12, %c0_13], %17 {strides = array<i32>} : memref<8x1xf32, #tpu.memory_space<vmem>>, vector<8x1xf32>,
    return
  }
  func.func @transform_0(%arg0: i32) -> (i32, i32) {
    %c0_i32 = arith.constant 0 : i32
    %c0_i32_0 = arith.constant 0 : i32
    return %arg0, %c0_i32 : i32, i32
  }
  func.func @transform_1(%arg0: i32) -> (i32, i32) {
    %c0_i32 = arith.constant 0 : i32
    %c0_i32_0 = arith.constant 0 : i32
    %c0_i32_1 = arith.constant 0 : i32
    return %c0_i32, %c0_i32_0 : i32, i32
  }
  func.func @transform_2(%arg0: i32) -> (i32, i32) {
    %c0_i32 = arith.constant 0 : i32
    %c0_i32_0 = arith.constant 0 : i32
    %c0_i32_1 = arith.constant 0 : i32
    return %c0_i32, %c0_i32_0 : i32, i32
  }
  func.func @transform_3(%arg0: i32) -> (i32, i32) {
    %c0_i32 = arith.constant 0 : i32
    %c0_i32_0 = arith.constant 0 : i32
    %c0_i32_1 = arith.constant 0 : i32
    return %c0_i32, %c0_i32_0 : i32, i32
  }
  func.func @transform_4(%arg0: i32) -> (i32, i32) {
    %c0_i32 = arith.constant 0 : i32
    %c0_i32_0 = arith.constant 0 : i32
    %c0_i32_1 = arith.constant 0 : i32
    return %c0_i32, %c0_i32_0 : i32, i32
  }
  func.func @transform_5(%arg0: i32) -> (i32, i32) {
    %c0_i32 = arith.constant 0 : i32
    %c0_i32_0 = arith.constant 0 : i32
    return %arg0, %c0_i32 : i32, i32
  }
}

</mosaic_0001>

<llo_original>
// kernel: tpu_custom_call.1
$region0: #{tpu_custom_call.1}
  #allocation0 [shape = 'u32[]', space=smem, size = 0x4, offset = 0x4, fixed_abs, tag = 'smem constant byte address 0x4 - core index']
  #allocation1 [shape = 'u32[144,128]{1,0:T(1,128)}', space=vmem, size = 0x12000, scoped, tag = 'internal scratch']
  #allocation2 [shape = 'f32[1,1]{1,0:T(1,128)S(6)}', space=smem, size = 0x200, scoped, tag = 'scoped memory for tpu_custom_call.1']
  %s0 = inlined_call_operand.vmem [shape: f32[8,4], index: 0, kind: input, shape index: {}]
  %s1 = inlined_call_operand.vmem [shape: f32[4,128], index: 1, kind: input, shape index: {}]
  %s2 = inlined_call_operand.vmem [shape: f32[1,128], index: 2, kind: input, shape index: {}]
  %s3 = inlined_call_operand.vmem [shape: f32[1,128], index: 3, kind: input, shape index: {}]
  %s4 = inlined_call_operand.<no memory space> [shape: f32[1,1], index: 4, kind: input, shape index: {}]
  %s5 = inlined_call_operand.vmem [shape: f32[8,1], index: 5, kind: output, shape index: {}]
  %s6 = sld [smem:[#allocation0]]
  $region30: #{tpu_custom_call.1} parent=0
    _
  %s8 = ssub.s32 1, %s6
  %s9 = scalar_select 0, %s8, %s6
  %10 = sst [smem:[#allocation2]] %s4
  // Predicated region
  $region2: #{tpu_custom_call.1} parent=0 // pred_check
    _
  $region3: #{tpu_custom_call.1} parent=0 // pred_check_branch
    %12 = sbr.rel (0) target = $region5
  $region4: #{tpu_custom_call.1} parent=0 // pred_region
    _
  $region5: #{tpu_custom_call.1} parent=0 // pred_fallthru
    _
  // Predicated region
  $region6: #{tpu_custom_call.1} parent=0 // pred_check
    _
  $region7: #{tpu_custom_call.1} parent=0 // pred_check_branch
    %14 = sbr.rel (0) target = $region9
  $region8: #{tpu_custom_call.1} parent=0 // pred_region
    _
  $region9: #{tpu_custom_call.1} parent=0 // pred_fallthru
    _
  // Predicated region
  $region10: #{tpu_custom_call.1} parent=0 // pred_check
    _
  $region11: #{tpu_custom_call.1} parent=0 // pred_check_branch
    %16 = sbr.rel (0) target = $region13
  $region12: #{tpu_custom_call.1} parent=0 // pred_region
    _
  $region13: #{tpu_custom_call.1} parent=0 // pred_fallthru
    _
  // Predicated region
  $region14: #{tpu_custom_call.1} parent=0 // pred_check
    _
  $region15: #{tpu_custom_call.1} parent=0 // pred_check_branch
    %18 = sbr.rel (0) target = $region17
  $region16: #{tpu_custom_call.1} parent=0 // pred_region
    _
  $region17: #{tpu_custom_call.1} parent=0 // pred_fallthru
    _
  // Predicated region
  $region18: #{tpu_custom_call.1} parent=0 // pred_check
    _
  $region19: #{tpu_custom_call.1} parent=0 // pred_check_branch
    %20 = sbr.rel (0) target = $region21
  $region20: #{tpu_custom_call.1} parent=0 // pred_region
    _
  $region21: #{tpu_custom_call.1} parent=0 // pred_fallthru
    _
  %v21 = vld [vmem:[%s0] sm:$0xff]
  %v22 = vld [vmem:[%s1] sm:$0xf]
  %v23 = vld [vmem:[%s2] sm:$0x1]
  %v25 = vlaneseq
  %v26 = vshrl.u32 %v25, 7
  %v27 = vsub.s32 0, %v26
  %v28 = vrot.slane %v23, %v27
  %vm30 = vcmask 31744
  %v32 = vsel %vm30, %v21, 0
  %vm34 = vcmask 1043456
  %v36 = vsel %vm34, %v22, 0
  %38 = vmatprep.subr.mxu0 0.0
  %39 = vmatpush1.msra.mxu0 %v36
  %40 = vmatprep.subr.mxu0 0.0
  %41 = vmatpush1.msra.mxu0 0.0
  %42 = vmatprep.subr.mxu0 0.0
  %43 = vmatpush1.msra.mxu0 0.0
  %44 = vmatprep.subr.mxu0 0.0
  %45 = vmatpush1.msra.mxu0 0.0
  %46 = vmatprep.subr.mxu0 0.0
  %47 = vmatpush1.msra.mxu0 0.0
  %48 = vmatprep.subr.mxu0 0.0
  %49 = vmatpush1.msra.mxu0 0.0
  %50 = vmatprep.subr.mxu0 0.0
  %51 = vmatpush1.msra.mxu0 0.0
  %52 = vmatprep.subr.mxu0 0.0
  %53 = vmatpush1.msra.mxu0 0.0
  %54 = vmatprep.subr.mxu0 0.0
  %55 = vmatpush1.msra.mxu0 0.0
  %56 = vmatprep.subr.mxu0 0.0
  %57 = vmatpush1.msra.mxu0 0.0
  %58 = vmatprep.subr.mxu0 0.0
  %59 = vmatpush1.msra.mxu0 0.0
  %60 = vmatprep.subr.mxu0 0.0
  %61 = vmatpush1.msra.mxu0 0.0
  %62 = vmatprep.subr.mxu0 0.0
  %63 = vmatpush1.msra.mxu0 0.0
  %64 = vmatprep.subr.mxu0 0.0
  %65 = vmatpush1.msra.mxu0 0.0
  %66 = vmatprep.subr.mxu0 0.0
  %67 = vmatpush1.msra.mxu0 0.0
  %68 = vmatprep.subr.mxu0 0.0
  %69 = vmatpush1.msra.mxu0 0.0
  %70 = vmatprep.subr.mxu0 0.0
  %71 = vmatpush1.msra.mxu0 0.0
  %72 = vmatprep.subr.mxu0 0.0
  %73 = vmatpush1.msra.mxu0 0.0
  %74 = vmatprep.subr.mxu0 0.0
  %75 = vmatpush1.msra.mxu0 0.0
  %76 = vmatprep.subr.mxu0 0.0
  %77 = vmatpush1.msra.mxu0 0.0
  %78 = vmatprep.subr.mxu0 0.0
  %79 = vmatpush1.msra.mxu0 0.0
  %80 = vmatprep.subr.mxu0 0.0
  %81 = vmatpush1.msra.mxu0 0.0
  %82 = vmatprep.subr.mxu0 0.0
  %83 = vmatpush1.msra.mxu0 0.0
  %84 = vmatprep.subr.mxu0 0.0
  %85 = vmatpush1.msra.mxu0 0.0
  %86 = vmatprep.subr.mxu0 0.0
  %87 = vmatpush1.msra.mxu0 0.0
  %88 = vmatprep.subr.mxu0 0.0
  %89 = vmatpush1.msra.mxu0 0.0
  %90 = vmatprep.subr.mxu0 0.0
  %91 = vmatpush1.msra.mxu0 0.0
  %92 = vmatprep.subr.mxu0 0.0
  %93 = vmatpush1.msra.mxu0 0.0
  %94 = vmatprep.subr.mxu0 0.0
  %95 = vmatpush1.msra.mxu0 0.0
  %96 = vmatprep.subr.mxu0 0.0
  %97 = vmatpush1.msra.mxu0 0.0
  %98 = vmatprep.subr.mxu0 0.0
  %99 = vmatpush1.msra.mxu0 0.0
  %100 = vmatprep.subr.mxu0 0.0
  %101 = vmatpush1.msra.mxu0 0.0
  %102 = vmatprep.mubr.f32.mxu0 0.0
  %103 = vmatmul.mubr.f32.gmra.mrb[0].mxu0 %v32
  %v104 = vpop.f32.mrb[0].mxu0
  %v105 = vadd.f32 %v28, %v104
  %v106 = vpop.f32.mrb[0].mxu0
  %107 = vdwg.mxu0
  %v108 = vmax.f32 %v105, 0.0
  %v109 = vld [vmem:[%s3] sm:$0x1]
  %v111 = vlaneseq
  %v112 = vshrl.u32 %v111, 7
  %v113 = vsub.s32 0, %v112
  %v114 = vrot.slane %v109, %v113
  %v116 = vmul.f32 %v108, %v114
  %117 = vadd.xlane.f32.xlu0 %v116
  %v118 = vpop.xlane.xlu0 %117
  %s119 = sld [smem:[#allocation2]]
  %v120 = vstv %s119
  %v121 = vadd.f32 %v118, %v120
  %v122 = vmax.f32 %v121, 0.0
  %vm123 = vcmask 7168
  %124 = vst.msk [vmem:[%s5] sm:$0xff] %vm123, %v122
  // Predicated region
  $region22: #{tpu_custom_call.1} parent=0 // pred_check
    _
  $region23: #{tpu_custom_call.1} parent=0 // pred_check_branch
    %126 = sbr.rel (0) target = $region25
  $region24: #{tpu_custom_call.1} parent=0 // pred_region
    _
  $region25: #{tpu_custom_call.1} parent=0 // pred_fallthru
    _
  // Predicated region
  $region26: #{tpu_custom_call.1} parent=0 // pred_check
    _
  $region27: #{tpu_custom_call.1} parent=0 // pred_check_branch
    %128 = sbr.rel (0) target = $region29
  $region28: #{tpu_custom_call.1} parent=0 // pred_region
    _
  $region29: #{tpu_custom_call.1} parent=0 // pred_fallthru
    _

</llo_original>
